<compile_context>
chip_gen: v7x
topology: tpu7x:2x2x1
jax: 0.10.0
libtpu: 0.0.40
codegen_flags: <defaults>
</compile_context>

<pallas_src>
import functools

import jax
import jax.numpy as jnp
from jax.experimental import pallas as pl
from jax.experimental.pallas import tpu as pltpu


def _matmul_bias_relu_kernel(p_ref, w_ref, b_ref, o_ref, *, use_bf16_mxu):
    """out[b] = relu(W @ patches[b] + bias) for one batch element.

    p_ref: (1, K, OHW)    im2col patches for this batch element
    w_ref: (Cout, K)      reshaped conv weight
    b_ref: (Cout, 1)      bias (column vector)
    o_ref: (1, Cout, OHW) lane-dense output block
    """
    p = p_ref[0]          # (K, OHW)
    w = w_ref[...]        # (Cout, K)
    if use_bf16_mxu:
        # MXU operands in bf16 (v5e/v6e bf16-native MXU); accumulate in f32.
        # Elementwise epilogue (bias add, ReLU) stays in f32.
        p = p.astype(jnp.bfloat16)
        w = w.astype(jnp.bfloat16)
    acc = jnp.dot(w, p, preferred_element_type=jnp.float32)   # (Cout, OHW)
    acc = acc + b_ref[...]            # broadcast (Cout, 1) over lanes
    acc = jnp.maximum(acc, 0.0)       # ReLU (activation_fn)
    o_ref[...] = acc.reshape(o_ref.shape).astype(o_ref.dtype)


def _normalize_pad(padding):
    """nn.ZeroPad2d padding -> (left, right, top, bottom)."""
    if not padding:
        return (0, 0, 0, 0)
    if isinstance(padding, int):
        return (padding,) * 4
    padding = tuple(int(p) for p in padding)
    if len(padding) == 4:       # (left, right, top, bottom)
        return padding
    if len(padding) == 2:       # (pad_w, pad_h)
        pw, ph = padding
        return (pw, pw, ph, ph)
    raise ValueError(f"unsupported padding spec: {padding!r}")


def slim_conv2d(x_nchw, w_oihw, b, *, stride, padding, use_bf16_mxu=False):
    """Forward pass of SlimConv2d. Takes/returns NCHW like PyTorch."""
    n, cin, h, w = x_nchw.shape
    cout, _, kh, kw = w_oihw.shape
    sh, sw = (stride, stride) if isinstance(stride, int) else tuple(stride)
    pad_l, pad_r, pad_t, pad_b = _normalize_pad(padding)

    # --- wrapper glue: ZeroPad2d + im2col gather (layout plumbing, 0 FLOPs) -
    xp = x_nchw
    if pad_l or pad_r or pad_t or pad_b:
        xp = jnp.pad(xp, ((0, 0), (0, 0), (pad_t, pad_b), (pad_l, pad_r)))
    hp, wp = int(xp.shape[2]), int(xp.shape[3])
    oh = (hp - kh) // sh + 1
    ow = (wp - kw) // sw + 1
    ohw = oh * ow
    k_total = kh * kw * cin

    # One strided slice per kernel tap; striding is handled here so the
    # Pallas kernel sees a dense (K, OH*OW) operand.
    taps = [
        jax.lax.slice(
            xp,
            (0, 0, i, j),
            (n, cin, i + (oh - 1) * sh + 1, j + (ow - 1) * sw + 1),
            (1, 1, sh, sw))
        for i in range(kh) for j in range(kw)
    ]
    # (N, KH*KW, Cin, OH, OW) -> (N, K, OH*OW); K ordered as (i, j, cin).
    patches = jnp.stack(taps, axis=1).reshape(n, k_total, ohw)

    # OIHW -> (Cout, KH, KW, Cin) -> (Cout, K): same (i, j, cin) ordering.
    w_mat = jnp.transpose(w_oihw, (0, 2, 3, 1)).reshape(cout, k_total)
    b_col = b.reshape(cout, 1)

    # Rough per-grid-step VMEM footprint (double-buffered patches/output
    # blocks + resident weight/bias), accounting for (8, 128) tile padding.
    # TODO(synk): for very large images, tile OH*OW over a 2nd grid axis.
    def _pad_to(v, m):
        return ((v + m - 1) // m) * m
    itm = jnp.dtype(x_nchw.dtype).itemsize
    vmem_est = (
        2 * _pad_to(k_total, 8) * _pad_to(ohw, 128) * itm      # patches blocks
        + 2 * _pad_to(cout, 8) * _pad_to(ohw, 128) * itm       # output blocks
        + _pad_to(cout, 8) * _pad_to(k_total, 128) * itm       # weight
        + _pad_to(cout, 8) * 128 * itm)                        # bias
    assert vmem_est < 16 * 1024 * 1024, (
        "per-step blocks exceed conservative VMEM budget; tile OH*OW")

    flops = 2 * n * cout * k_total * ohw
    bytes_accessed = (patches.size + w_mat.size + b_col.size
                      + n * cout * ohw) * itm
    cost = pl.CostEstimate(
        flops=flops, transcendentals=0, bytes_accessed=bytes_accessed)

    kern = functools.partial(_matmul_bias_relu_kernel,
                             use_bf16_mxu=use_bf16_mxu)

    out_flat = pl.pallas_call(
        kern,
        out_shape=jax.ShapeDtypeStruct((n, cout, ohw), x_nchw.dtype),
        grid_spec=pltpu.PrefetchScalarGridSpec(
            num_scalar_prefetch=0,
            grid=(n,),
            in_specs=[
                pl.BlockSpec((1, k_total, ohw), lambda i: (i, 0, 0)),
                pl.BlockSpec((cout, k_total), lambda i: (0, 0)),
                pl.BlockSpec((cout, 1), lambda i: (0, 0)),
            ],
            out_specs=pl.BlockSpec((1, cout, ohw), lambda i: (i, 0, 0)),
        ),
        compiler_params=pltpu.CompilerParams(
            dimension_semantics=("parallel",)),
        cost_estimate=cost,
    )(patches, w_mat, b_col)

    # Free reshape (no transpose): (N, Cout, OH*OW) -> (N, Cout, OH, OW).
    return out_flat.reshape(n, cout, oh, ow)


def _xavier_uniform_conv(key, cout, cin, kh, kw):
    # nn.init.xavier_uniform_ on a Conv2d weight (OIHW):
    # fan_in = cin*kh*kw, fan_out = cout*kh*kw, bound = sqrt(6/(fan_in+fan_out))
    fan_in = cin * kh * kw
    fan_out = cout * kh * kw
    bound = (6.0 / (fan_in + fan_out)) ** 0.5
    return jax.random.uniform(
        key, (cout, cin, kh, kw), jnp.float32, minval=-bound, maxval=bound)


if __name__ == "__main__":
    # Module config: SlimConv2d(in=4, out=8, kernel=3, stride=1, padding=1)
    N, CIN, H, W = 2, 4, 16, 16
    COUT, K, STRIDE, PAD = 8, 3, 1, 1
    BIAS_INIT = 0.1   # constructor arg (default 0); nonzero to exercise bias

    key = jax.random.PRNGKey(0)
    k_x, k_w = jax.random.split(key)

    x = jax.random.normal(k_x, (N, CIN, H, W), jnp.float32)
    w = _xavier_uniform_conv(k_w, COUT, CIN, K, K)
    b = jnp.full((COUT,), BIAS_INIT, jnp.float32)   # nn.init.constant_(bias, .)

    out = slim_conv2d(x, w, b, stride=STRIDE, padding=PAD)
    out = jax.block_until_ready(out)

    # Sanity check against XLA's conv (same ZeroPad2d + Conv2d + ReLU math).
    xp = jnp.pad(x, ((0, 0), (0, 0), (PAD, PAD), (PAD, PAD)))
    ref = jax.lax.conv_general_dilated(
        xp, w, window_strides=(STRIDE, STRIDE), padding="VALID",
        dimension_numbers=("NCHW", "OIHW", "NCHW"))
    ref = jnp.maximum(ref + b.reshape(1, COUT, 1, 1), 0.0)

    assert out.shape == ref.shape == (N, COUT, H, W)
    assert jnp.allclose(out, ref, rtol=1e-4, atol=1e-4)
    print("KERNEL_OK")
</pallas_src>

<mosaic_0001>
module attributes {stable_mosaic.version = 11 : i64} {
  func.func @_matmul_bias_relu_kernel(%arg0: i32, %arg1: memref<1x36x256xf32, #tpu.memory_space<vmem>>, %arg2: memref<8x36xf32, #tpu.memory_space<vmem>>, %arg3: memref<8x1xf32, #tpu.memory_space<vmem>>, %arg4: memref<1x8x256xf32, #tpu.memory_space<vmem>>) attributes {dimension_semantics = [#tpu.dimension_semantics<parallel>], iteration_bounds = array<i64: 2>, scalar_prefetch = 0 : i64, scratch_operands = 0 : i64, tpu.core_type = #tpu.core_type<tc>, window_params = [{transform_indices = @transform_0, window_bounds = array<i64: 1, 36, 256>}, {pipeline_mode = #tpu.pipeline_mode<synchronous>, transform_indices = @transform_1, window_bounds = array<i64: 8, 36>}, {pipeline_mode = #tpu.pipeline_mode<synchronous>, transform_indices = @transform_2, window_bounds = array<i64: 8, 1>}, {transform_indices = @transform_3, window_bounds = array<i64: 1, 8, 256>}]} {
    %c0 = arith.constant 0 : index
    %c0_0 = arith.constant 0 : index
    %c0_1 = arith.constant 0 : index
    %0 = vector.load %arg1[%c0, %c0_0, %c0_1] : memref<1x36x256xf32, #tpu.memory_space<vmem>>, vector<1x36x256xf32>
    %1 = vector.shape_cast %0 : vector<1x36x256xf32> to vector<36x256xf32>
    %c0_2 = arith.constant 0 : index
    %c0_3 = arith.constant 0 : index
    %2 = vector.load %arg2[%c0_2, %c0_3] : memref<8x36xf32, #tpu.memory_space<vmem>>, vector<8x36xf32>
    %cst = arith.constant dense<0.000000e+00> : vector<8x256xf32>
    %3 = tpu.matmul %2, %1, %cst {dimension_numbers = #tpu.dot_dimension_numbers<[1], [0], [0], [1], [0, 0, 1, 1], [], []>} : vector<8x36xf32>, vector<36x256xf32>, vector<8x256xf32> -> vector<8x256xf32>
    %c0_4 = arith.constant 0 : index
    %c0_5 = arith.constant 0 : index
    %4 = vector.load %arg3[%c0_4, %c0_5] : memref<8x1xf32, #tpu.memory_space<vmem>>, vector<8x1xf32>
    %5 = vector.broadcast %4 : vector<8x1xf32> to vector<8x256xf32>
    %6 = arith.addf %3, %5 : vector<8x256xf32>
    %cst_6 = arith.constant 0.000000e+00 : f32
    %7 = vector.broadcast %cst_6 : f32 to vector<8x256xf32>
    %8 = arith.maximumf %6, %7 : vector<8x256xf32>
    %9 = vector.shape_cast %8 : vector<8x256xf32> to vector<1x8x256xf32>
    %c0_7 = arith.constant 0 : index
    %c0_8 = arith.constant 0 : index
    %c0_9 = arith.constant 0 : index
    %10 = vector.load %arg4[%c0_7, %c0_8, %c0_9] : memref<1x8x256xf32, #tpu.memory_space<vmem>>, vector<1x8x256xf32>
    tpu.vector_store %arg4[%c0_7, %c0_8, %c0_9], %9 {strides = array<i32>} : memref<1x8x256xf32, #tpu.memory_space<vmem>>, vector<1x8x256xf32>,
    return
  }
  func.func @transform_0(%arg0: i32) -> (i32, i32, i32) {
    %c0_i32 = arith.constant 0 : i32
    %c0_i32_0 = arith.constant 0 : i32
    %c0_i32_1 = arith.constant 0 : i32
    return %arg0, %c0_i32, %c0_i32_0 : i32, i32, i32
  }
  func.func @transform_1(%arg0: i32) -> (i32, i32) {
    %c0_i32 = arith.constant 0 : i32
    %c0_i32_0 = arith.constant 0 : i32
    %c0_i32_1 = arith.constant 0 : i32
    return %c0_i32, %c0_i32_0 : i32, i32
  }
  func.func @transform_2(%arg0: i32) -> (i32, i32) {
    %c0_i32 = arith.constant 0 : i32
    %c0_i32_0 = arith.constant 0 : i32
    %c0_i32_1 = arith.constant 0 : i32
    return %c0_i32, %c0_i32_0 : i32, i32
  }
  func.func @transform_3(%arg0: i32) -> (i32, i32, i32) {
    %c0_i32 = arith.constant 0 : i32
    %c0_i32_0 = arith.constant 0 : i32
    %c0_i32_1 = arith.constant 0 : i32
    return %arg0, %c0_i32, %c0_i32_0 : i32, i32, i32
  }
}

</mosaic_0001>

<llo_original>
// kernel: tpu_custom_call.1
$region0: #{tpu_custom_call.1}
  #allocation0 [shape = 'u32[]', space=smem, size = 0x4, offset = 0x4, fixed_abs, tag = 'smem constant byte address 0x4 - core index']
  #allocation1 [shape = 'u32[144,128]{1,0:T(1,128)}', space=vmem, size = 0x12000, scoped, tag = 'internal scratch']
  %s0 = inlined_call_operand.vmem [shape: f32[2,36,256], index: 0, kind: input, shape index: {}]
  %s1 = inlined_call_operand.vmem [shape: f32[8,36], index: 1, kind: input, shape index: {}]
  %s2 = inlined_call_operand.vmem [shape: f32[8,1], index: 2, kind: input, shape index: {}]
  %s3 = inlined_call_operand.hbm [shape: f32[2,8,256], index: 3, kind: output, shape index: {}]
  %s4 = sld [smem:[#allocation0]]
  $region45: #{tpu_custom_call.1} parent=0
    _
  %s6 = ssub.s32 1, %s4
  %s7 = scalar_select 0, %s6, %s4
  $region1: #{tpu_custom_call.1} parent=0
    #allocation2 [shape = 'u8[16384]{0}', space=vmem, size = 0x4000, scoped, tag = 'output window, operand 0']
    #allocation3 [shape = 's32[2]{0}', space=sflag, size = 0x8, scoped, tag = 'scoped memory for tpu_custom_call.1']
    %8 = vsyncpa [#allocation3], 0
    %s9 = scalar_lea.sflag [#allocation3], 1
    %10 = vsyncpa %s9, 0
    loop: start=0, step=1, limit=4
    $region2: #{tpu_custom_call.1} parent=1 // loop_pre_header
      _
    $region3: #{tpu_custom_call.1} parent=1 // loop_header
      %s12 = sphi 0, %s16
      %p13 = scmp.ge.s32.totalorder %s12, 4
      %s22 = sphi 0, %s24
      %s25 = sphi 0, %s22
      %s26 = sphi 0, %s25
      %s42 = sphi 0, %s26
      %s46 = sphi 0, %s46
      %s48 = sphi 0, %s46
      %s49 = sphi 0, %s48
      %s63 = sphi 0, %s49
      %s67 = sphi 0, %s67
      %s69 = sphi 0, %s67
      %s70 = sphi 0, %s69
      %s84 = sphi 0, %s70
      %s90 = sphi 0, %s92
      %s93 = sphi 0, %s90
      %s94 = sphi 0, %s93
      %s110 = sphi 0, %s94
    $region4: #{tpu_custom_call.1} parent=1 // loop_header_branch
      %15 = sbr.rel (%p13) target = $region8
    $region5: #{tpu_custom_call.1} parent=1 // loop_body
      %s17 = ssub.s32 %s12, 1
      %s18 = ssub.s32 %s12, 2
      %s19 = sadd.s32 %s12, 1
      %s20 = ssub.s32 %s12, %s19
      %p21 = scmp.eq.s32.totalorder %s20, 0
      %s23 = sadd.s32 %s22, 1
      %s24 = scalar_select %p21, %s22, %s23
      %p27 = pneg %p21
      %p28 = scmp.eq.s32.totalorder %s12, 1
      %p29 = por %p27, %p28
      %p30 = scmp.ne.s32.totalorder %s22, %s25
      %p31 = scmp.eq.s32.totalorder %s12, 0
      %p32 = por %p30, %p31
      %p33 = scmp.ne.s32.totalorder %s22, %s25
      %p34 = scmp.eq.s32.totalorder %s17, 1
      %p35 = por %p33, %p34
      %p36 = scmp.ne.s32.totalorder %s25, %s26
      %p37 = scmp.eq.s32.totalorder %s17, 0
      %p38 = por %p36, %p37
      %p39 = scmp.ne.s32.totalorder %s25, %s26
      %p40 = scmp.eq.s32.totalorder %s18, 1
      %p41 = por %p39, %p40
      %p43 = scmp.ne.s32.totalorder %s26, %s42
      %p44 = scmp.eq.s32.totalorder %s18, 0
      %p45 = por %p43, %p44
      %s47 = sadd.s32 %s46, 1
      %p50 = scmp.eq.s32.totalorder %s12, 1
      %p51 = scmp.ne.s32.totalorder %s46, %s48
      %p52 = scmp.eq.s32.totalorder %s12, 0
      %p53 = por %p51, %p52
      %p54 = scmp.ne.s32.totalorder %s46, %s48
      %p55 = scmp.eq.s32.totalorder %s17, 1
      %p56 = por %p54, %p55
      %p57 = scmp.ne.s32.totalorder %s48, %s49
      %p58 = scmp.eq.s32.totalorder %s17, 0
      %p59 = por %p57, %p58
      %p60 = scmp.ne.s32.totalorder %s48, %s49
      %p61 = scmp.eq.s32.totalorder %s18, 1
      %p62 = por %p60, %p61
      %p64 = scmp.ne.s32.totalorder %s49, %s63
      %p65 = scmp.eq.s32.totalorder %s18, 0
      %p66 = por %p64, %p65
      %s68 = sadd.s32 %s67, 1
      %p71 = scmp.eq.s32.totalorder %s12, 1
      %p72 = scmp.ne.s32.totalorder %s67, %s69
      %p73 = scmp.eq.s32.totalorder %s12, 0
      %p74 = por %p72, %p73
      %p75 = scmp.ne.s32.totalorder %s67, %s69
      %p76 = scmp.eq.s32.totalorder %s17, 1
      %p77 = por %p75, %p76
      %p78 = scmp.ne.s32.totalorder %s69, %s70
      %p79 = scmp.eq.s32.totalorder %s17, 0
      %p80 = por %p78, %p79
      %p81 = scmp.ne.s32.totalorder %s69, %s70
      %p82 = scmp.eq.s32.totalorder %s18, 1
      %p83 = por %p81, %p82
      %p85 = scmp.ne.s32.totalorder %s70, %s84
      %p86 = scmp.eq.s32.totalorder %s18, 0
      %p87 = por %p85, %p86
      %s88 = ssub.s32 %s12, %s19
      %p89 = scmp.eq.s32.totalorder %s88, 0
      %s91 = sadd.s32 %s90, 1
      %s92 = scalar_select %p89, %s90, %s91
      %p95 = pneg %p89
      %p96 = scmp.eq.s32.totalorder %s12, 1
      %p97 = por %p95, %p96
      %p98 = scmp.ne.s32.totalorder %s90, %s93
      %p99 = scmp.eq.s32.totalorder %s12, 0
      %p100 = por %p98, %p99
      %p101 = scmp.ne.s32.totalorder %s90, %s93
      %p102 = scmp.eq.s32.totalorder %s17, 1
      %p103 = por %p101, %p102
      %p104 = scmp.ne.s32.totalorder %s93, %s94
      %p105 = scmp.eq.s32.totalorder %s17, 0
      %p106 = por %p104, %p105
      %p107 = scmp.ne.s32.totalorder %s93, %s94
      %p108 = scmp.eq.s32.totalorder %s18, 1
      %p109 = por %p107, %p108
      %p111 = scmp.ne.s32.totalorder %s94, %s110
      %p112 = scmp.eq.s32.totalorder %s18, 0
      %p113 = por %p111, %p112
      %p114 = scmp.le.s32.totalorder 1, %s12
      %p115 = scmp.lt.s32.totalorder %s12, 3
      %p116 = pnand %p114, %p115
      %p117 = pneg %p116
      // Predicated region
      $region9: #{tpu_custom_call.1} parent=5 // pred_check
        _
      $region10: #{tpu_custom_call.1} parent=5 // pred_check_branch
        %119 = sbr.rel (%p116) target = $region12
      $region11: #{tpu_custom_call.1} parent=5 // pred_region
        %s120 = ssub.s32 %s12, 1
        // Predicated region
        $region13: #{tpu_custom_call.1} parent=11 // pred_check
          %p121 = pneg %p59
        $region14: #{tpu_custom_call.1} parent=11 // pred_check_branch
          %123 = sbr.rel (%p121) target = $region16
        $region15: #{tpu_custom_call.1} parent=11 // pred_region
          _
        $region16: #{tpu_custom_call.1} parent=11 // pred_fallthru
          _
        // Predicated region
        $region17: #{tpu_custom_call.1} parent=11 // pred_check
          %p124 = pneg %p80
        $region18: #{tpu_custom_call.1} parent=11 // pred_check_branch
          %126 = sbr.rel (%p124) target = $region20
        $region19: #{tpu_custom_call.1} parent=11 // pred_region
          _
        $region20: #{tpu_custom_call.1} parent=11 // pred_fallthru
          _
      $region12: #{tpu_custom_call.1} parent=5 // pred_fallthru
        _
      %p127 = scmp.lt.s32.totalorder %s12, 2
      // Predicated region
      $region21: #{tpu_custom_call.1} parent=5 // pred_check
        %p128 = pneg %p127
      $region22: #{tpu_custom_call.1} parent=5 // pred_check_branch
        %130 = sbr.rel (%p128) target = $region24
      $region23: #{tpu_custom_call.1} parent=5 // pred_region
        // Predicated region
        $region25: #{tpu_custom_call.1} parent=23 // pred_check
          %p131 = pneg %p32
        $region26: #{tpu_custom_call.1} parent=23 // pred_check_branch
          %133 = sbr.rel (%p131) target = $region28
        $region27: #{tpu_custom_call.1} parent=23 // pred_region
          %p134 = scmp.lt.s32.totalorder %s12, 1
          %s135 = scalar_select %p134, %s12, 1
          %s136 = smul.addr %s135, 10
          %s137 = smul.addr %s136, 8
          %s138 = scalar_lea.vmem %s0, %s137
        $region28: #{tpu_custom_call.1} parent=23 // pred_fallthru
          _
      $region24: #{tpu_custom_call.1} parent=5 // pred_fallthru
        _
      %p139 = scmp.le.s32.totalorder 1, %s12
      %p140 = scmp.lt.s32.totalorder %s12, 3
      %p141 = pnand %p139, %p140
      %p142 = pneg %p141
      // Predicated region
      $region29: #{tpu_custom_call.1} parent=5 // pred_check
        _
      $region30: #{tpu_custom_call.1} parent=5 // pred_check_branch
        %144 = sbr.rel (%p141) target = $region32
      $region31: #{tpu_custom_call.1} parent=5 // pred_region
        %s145 = ssub.s32 %s12, 1
        %p146 = scmp.lt.s32.totalorder %s17, 1
        %s147 = scalar_select %p146, %s17, 1
        %s148 = smul.addr %s147, 10
        %s149 = smul.addr %s148, 8
        %s150 = scalar_lea.vmem %s0, %s149
        %p151 = pneg %p38
        %p152 = pneg %p35
        %p153 = pneg %p59
        %p154 = pneg %p56
        %p155 = pneg %p80
        %p156 = pneg %p77
        %p157 = pneg %p106
        %p158 = pneg %p103
        %s159 = sand.u32 %s93, 1
        %s160 = scalar_lea.sflag [#allocation3], %s159
        %s161 = sand.u32 %s93, 1
        %s162 = smul.addr %s161, 16
        %s163 = scalar_lea.vmem [#allocation2], %s162
        %p164 = scmp.lt.s32.totalorder %s17, 1
        %s165 = scalar_select %p164, %s17, 1
        %s166 = smul.addr %s165, 10
        %s167 = smul.addr %s166, 8
        %s168 = scalar_lea.vmem %s0, %s167
        %v169 = vld [vmem:[%s168] sm:$0xff]
        %v170 = vld [vmem:[%s168 + $0x8] sm:$0xff]
        %v171 = vld [vmem:[%s168 + $0x10] sm:$0xff]
        %v172 = vld [vmem:[%s168 + $0x18] sm:$0xff]
        %v173 = vld [vmem:[%s168 + $0x20] sm:$0xff]
        %v174 = vld [vmem:[%s168 + $0x28] sm:$0xff]
        %v175 = vld [vmem:[%s168 + $0x30] sm:$0xff]
        %v176 = vld [vmem:[%s168 + $0x38] sm:$0xff]
        %v177 = vld [vmem:[%s168 + $0x40] sm:$0xf]
        %v178 = vld [vmem:[%s168 + $0x48] sm:$0xf]
        %v179 = vld [vmem:[%s1] sm:$0xff]
        %v180 = vld [vmem:[%s2] sm:$0xff]
        %182 = vset.pattern.permute.xlu0 0
        %183 = vperm.xlu0 %182, %v180
        %v184 = vpop.permute.xlu0 %183
        %vm186 = vcmask 293888
        %v188 = vsel %vm186, %v179, 0
        %vm190 = vcmask 1043456
        %v192 = vsel %vm190, %v177, 0
        %v195 = vsel %vm190, %v178, 0
        %197 = vmatprep.subr.mxu0 %v170
        %198 = vmatpush1.msra.mxu0 %v169
        %199 = vmatprep.subr.mxu0 %v172
        %200 = vmatpush1.msra.mxu0 %v171
        %201 = vmatprep.subr.mxu0 %v174
        %202 = vmatpush1.msra.mxu0 %v173
        %203 = vmatprep.subr.mxu0 %v176
        %204 = vmatpush1.msra.mxu0 %v175
        %205 = vmatprep.subr.mxu0 %v195
        %206 = vmatpush1.msra.mxu0 %v192
        %207 = vmatprep.subr.mxu0 0.0
        %208 = vmatpush1.msra.mxu0 0.0
        %209 = vmatprep.subr.mxu0 0.0
        %210 = vmatpush1.msra.mxu0 0.0
        %211 = vmatprep.subr.mxu0 0.0
        %212 = vmatpush1.msra.mxu0 0.0
        %213 = vmatprep.subr.mxu0 0.0
        %214 = vmatpush1.msra.mxu0 0.0
        %215 = vmatprep.subr.mxu0 0.0
        %216 = vmatpush1.msra.mxu0 0.0
        %217 = vmatprep.subr.mxu0 0.0
        %218 = vmatpush1.msra.mxu0 0.0
        %219 = vmatprep.subr.mxu0 0.0
        %220 = vmatpush1.msra.mxu0 0.0
        %221 = vmatprep.subr.mxu0 0.0
        %222 = vmatpush1.msra.mxu0 0.0
        %223 = vmatprep.subr.mxu0 0.0
        %224 = vmatpush1.msra.mxu0 0.0
        %225 = vmatprep.subr.mxu0 0.0
        %226 = vmatpush1.msra.mxu0 0.0
        %227 = vmatprep.subr.mxu0 0.0
        %228 = vmatpush1.msra.mxu0 0.0
        %229 = vmatprep.subr.mxu0 0.0
        %230 = vmatpush1.msra.mxu0 0.0
        %231 = vmatprep.subr.mxu0 0.0
        %232 = vmatpush1.msra.mxu0 0.0
        %233 = vmatprep.subr.mxu0 0.0
        %234 = vmatpush1.msra.mxu0 0.0
        %235 = vmatprep.subr.mxu0 0.0
        %236 = vmatpush1.msra.mxu0 0.0
        %237 = vmatprep.subr.mxu0 0.0
        %238 = vmatpush1.msra.mxu0 0.0
        %239 = vmatprep.subr.mxu0 0.0
        %240 = vmatpush1.msra.mxu0 0.0
        %241 = vmatprep.subr.mxu0 0.0
        %242 = vmatpush1.msra.mxu0 0.0
        %243 = vmatprep.subr.mxu0 0.0
        %244 = vmatpush1.msra.mxu0 0.0
        %245 = vmatprep.subr.mxu0 0.0
        %246 = vmatpush1.msra.mxu0 0.0
        %247 = vmatprep.subr.mxu0 0.0
        %248 = vmatpush1.msra.mxu0 0.0
        %249 = vmatprep.subr.mxu0 0.0
        %250 = vmatpush1.msra.mxu0 0.0
        %251 = vmatprep.subr.mxu0 0.0
        %252 = vmatpush1.msra.mxu0 0.0
        %253 = vmatprep.subr.mxu0 0.0
        %254 = vmatpush1.msra.mxu0 0.0
        %255 = vmatprep.subr.mxu0 0.0
        %256 = vmatpush1.msra.mxu0 0.0
        %257 = vmatprep.subr.mxu0 0.0
        %258 = vmatpush1.msra.mxu0 0.0
        %259 = vmatprep.subr.mxu0 0.0
        %260 = vmatpush1.msra.mxu0 0.0
        %261 = vmatprep.mubr.f32.mxu0 0.0
        %262 = vmatmul.mubr.f32.gmra.mrb[0].mxu0 %v188
        %v263 = vpop.f32.mrb[0].mxu0
        %v264 = vadd.f32 %v184, %v263
        %v265 = vpop.f32.mrb[0].mxu0
        %v266 = vadd.f32 %v184, %v265
        %267 = vdwg.mxu0
        %v268 = vmax.f32 %v264, 0.0
        %v269 = vmax.f32 %v266, 0.0
        %270 = vst [vmem:[%s163] sm:$0xff] %v268
        %271 = vst [vmem:[%s163 + $0x8] sm:$0xff] %v269
        %s272 = sand.u32 %s93, 1
        %s273 = scalar_lea.sflag [#allocation3], %s272
        %s274 = sand.u32 %s93, 1
        %s275 = smul.addr %s274, 16
        %s276 = scalar_lea.vmem [#allocation2], %s275
        // Predicated region
        $region33: #{tpu_custom_call.1} parent=31 // pred_check
          %p277 = pneg %p103
        $region34: #{tpu_custom_call.1} parent=31 // pred_check_branch
          %279 = sbr.rel (%p277) target = $region36
        $region35: #{tpu_custom_call.1} parent=31 // pred_region
          %s281 = ssub.s32 256, 256
          %282 = vsyncadd %s273, %s281
          %s283 = smul.addr %s17, 2
          %s284 = smul.addr %s283, 128
          %s285 = scalar_lea.hbm %s3, %s284
          %s287 = sshll.u32 %s276, 4
          %s288 = int_to_ptr.vmem [resolvable:$true] %s287
          %290 = dma.vmem_to_hbm [thread:$0]  %s288, 256, %s285, %s273
        $region36: #{tpu_custom_call.1} parent=31 // pred_fallthru
          _
      $region32: #{tpu_custom_call.1} parent=5 // pred_fallthru
        _
      %p291 = scmp.le.s32.totalorder 2, %s12
      // Predicated region
      $region37: #{tpu_custom_call.1} parent=5 // pred_check
        %p292 = pneg %p291
      $region38: #{tpu_custom_call.1} parent=5 // pred_check_branch
        %294 = sbr.rel (%p292) target = $region40
      $region39: #{tpu_custom_call.1} parent=5 // pred_region
        %s295 = ssub.s32 %s12, 2
        // Predicated region
        $region41: #{tpu_custom_call.1} parent=39 // pred_check
          %p296 = pneg %p109
        $region42: #{tpu_custom_call.1} parent=39 // pred_check_branch
          %298 = sbr.rel (%p296) target = $region44
        $region43: #{tpu_custom_call.1} parent=39 // pred_region
          %s299 = sand.u32 %s94, 1
          %s300 = scalar_lea.sflag [#allocation3], %s299
          %s301 = sand.u32 %s94, 1
          %s302 = smul.addr %s301, 16
          %s303 = scalar_lea.vmem [#allocation2], %s302
          %304 = dma.done %s300, 256
        $region44: #{tpu_custom_call.1} parent=39 // pred_fallthru
          _
      $region40: #{tpu_custom_call.1} parent=5 // pred_fallthru
        _
    $region6: #{tpu_custom_call.1} parent=1 // loop_footer
      %s16 = sadd.s32 1, %s12
    $region7: #{tpu_custom_call.1} parent=1 // loop_footer_branch
      %11 = sbr.rel target = $region3
    $region8: #{tpu_custom_call.1} parent=1 // loop_exit
      _
    %305 = vsyncpa [#allocation3], 1
    %s306 = scalar_lea.sflag [#allocation3], 1
    %307 = vsyncpa %s306, 1

</llo_original>
